<compile_context>
chip_gen: v6e
topology: v6e:2x2x1
jax: 0.10.0
libtpu: 0.0.40
codegen_flags: <defaults>
</compile_context>

<pallas_src>
import functools

import jax
import jax.numpy as jnp
from jax.experimental import pallas as pl
from jax.experimental.pallas import tpu as pltpu


def _round_up(x, m):
    return ((x + m - 1) // m) * m


def _rmsnorm_kernel(x_ref, scale_ref, o_ref, *, eps, inv_d):
    # x_ref: (ROW_TILE, d_pad), scale_ref: (1, d_pad), o_ref: (ROW_TILE, d_pad)
    x = x_ref[...].astype(jnp.float32)
    ssq = jnp.sum(x * x, axis=-1, keepdims=True)           # XLU reduce, (ROW_TILE, 1)
    inv_norm = jax.lax.rsqrt(ssq * inv_d + eps)             # EUP rsqrt (free slot)
    y = (x * inv_norm) * scale_ref[...].astype(jnp.float32)
    o_ref[...] = y.astype(o_ref.dtype)


def _choose_row_tile(n_rows, d_pad, dtype):
    """Pick a sublane-aligned row tile that keeps double-buffered in+out <= ~32 MiB."""
    itemsize = jnp.dtype(dtype).itemsize
    pack = 8 * max(1, 4 // itemsize)                # 8 f32, 16 bf16, 32 int8
    per_tile_budget = 8 * 1024 * 1024               # bytes per (row_tile, d_pad) buffer
    max_rows = max(pack, per_tile_budget // max(1, d_pad * itemsize))
    max_rows = max(pack, (max_rows // pack) * pack)

    rows_min = _round_up(n_rows, pack)
    row_tile = min(max_rows, rows_min)

    # Keep at least 2 grid steps when there is enough work (v7x megacore sharding).
    if rows_min > 2 * pack and row_tile >= rows_min:
        row_tile = min(rows_min, _round_up((rows_min + 1) // 2, pack))
    return row_tile


def rmsnorm(x, scale, eps=1e-5):
    """RMSNorm over the last dim of x (batch, seq, d) with per-feature scale (d,)."""
    b, s, d = x.shape
    n_rows = b * s

    d_pad = _round_up(d, 128)
    row_tile = _choose_row_tile(n_rows, d_pad, x.dtype)
    n_rows_pad = _round_up(n_rows, row_tile)

    x2d = x.reshape(n_rows, d)
    if n_rows_pad != n_rows or d_pad != d:
        x2d = jnp.pad(x2d, ((0, n_rows_pad - n_rows), (0, d_pad - d)))
    scale2d = scale.reshape(1, d)
    if d_pad != d:
        scale2d = jnp.pad(scale2d, ((0, 0), (0, d_pad - d)))

    kernel = functools.partial(_rmsnorm_kernel, eps=eps, inv_d=1.0 / d)

    grid = (n_rows_pad // row_tile,)
    out2d = pl.pallas_call(
        kernel,
        out_shape=jax.ShapeDtypeStruct((n_rows_pad, d_pad), x.dtype),
        grid_spec=pltpu.PrefetchScalarGridSpec(
            num_scalar_prefetch=0,
            grid=grid,
            in_specs=[
                pl.BlockSpec((row_tile, d_pad), lambda i: (i, 0)),
                pl.BlockSpec((1, d_pad), lambda i: (0, 0)),  # constant index: no re-DMA
            ],
            out_specs=pl.BlockSpec((row_tile, d_pad), lambda i: (i, 0)),
        ),
        compiler_params=pltpu.CompilerParams(
            dimension_semantics=("parallel",),
            vmem_limit_bytes=48 * 1024 * 1024,
        ),
    )(x2d, scale2d)

    return out2d[:n_rows, :d].reshape(b, s, d)


def rmsnorm_ref(x, scale, eps=1e-5):
    x32 = x.astype(jnp.float32)
    norm = jnp.sqrt(jnp.mean(x32 ** 2, axis=-1, keepdims=True) + eps)
    return (x32 / norm * scale.astype(jnp.float32)).astype(x.dtype)


if __name__ == "__main__":
    key = jax.random.PRNGKey(0)

    # 1) Small smoke test matching the PyTorch module's (batch, seq, d) layout.
    batch, seq, d = 2, 8, 32
    x = jax.random.normal(key, (batch, seq, d), dtype=jnp.float32)
    scale = jnp.ones((d,), dtype=jnp.float32)  # nn.Parameter(torch.ones(d))
    out = jax.block_until_ready(rmsnorm(x, scale, eps=1e-5))
    ref = rmsnorm_ref(x, scale, eps=1e-5)
    assert out.shape == (batch, seq, d)
    assert jnp.allclose(out, ref, atol=1e-5, rtol=1e-5), "f32 small-d mismatch"

    # 2) Production-path test: lane-dense d (multiple of 128), bf16 activations.
    k1, k2 = jax.random.split(key)
    b2, s2, d2 = 2, 64, 256
    xb = jax.random.normal(k1, (b2, s2, d2), dtype=jnp.bfloat16)
    sb = jnp.ones((d2,), dtype=jnp.bfloat16)
    outb = jax.block_until_ready(rmsnorm(xb, sb, eps=1e-5))
    refb = rmsnorm_ref(xb, sb, eps=1e-5)
    assert outb.shape == (b2, s2, d2)
    assert jnp.allclose(outb.astype(jnp.float32), refb.astype(jnp.float32),
                        atol=3e-2, rtol=3e-2), "bf16 mismatch"

    # 3) Ragged shapes (rows and d not multiples of the tile/lane) exercise padding.
    b3, s3, d3 = 3, 5, 160
    xr = jax.random.normal(k2, (b3, s3, d3), dtype=jnp.float32)
    sr = jnp.ones((d3,), dtype=jnp.float32)
    outr = jax.block_until_ready(rmsnorm(xr, sr, eps=1e-5))
    refr = rmsnorm_ref(xr, sr, eps=1e-5)
    assert outr.shape == (b3, s3, d3)
    assert jnp.allclose(outr, refr, atol=1e-5, rtol=1e-5), "ragged mismatch"

    print("KERNEL_OK")
</pallas_src>

<mosaic_0001>
module attributes {stable_mosaic.version = 11 : i64} {
  func.func @_rmsnorm_kernel(%arg0: i32, %arg1: memref<16x128xf32, #tpu.memory_space<vmem>>, %arg2: memref<1x128xf32, #tpu.memory_space<vmem>>, %arg3: memref<16x128xf32, #tpu.memory_space<vmem>>) attributes {dimension_semantics = [#tpu.dimension_semantics<parallel>], iteration_bounds = array<i64: 1>, scalar_prefetch = 0 : i64, scratch_operands = 0 : i64, tpu.core_type = #tpu.core_type<tc>, window_params = [{transform_indices = @transform_0, window_bounds = array<i64: 16, 128>}, {pipeline_mode = #tpu.pipeline_mode<synchronous>, transform_indices = @transform_1, window_bounds = array<i64: 1, 128>}, {transform_indices = @transform_2, window_bounds = array<i64: 16, 128>}]} {
    %c0 = arith.constant 0 : index
    %c0_0 = arith.constant 0 : index
    %0 = vector.load %arg1[%c0, %c0_0] : memref<16x128xf32, #tpu.memory_space<vmem>>, vector<16x128xf32>
    %1 = arith.mulf %0, %0 : vector<16x128xf32>
    %cst = arith.constant dense<0.000000e+00> : vector<16xf32>
    %2 = vector.multi_reduction <add>, %1, %cst [1] : vector<16x128xf32> to vector<16xf32>
    %3 = vector.shape_cast %2 : vector<16xf32> to vector<16x1xf32>
    %cst_1 = arith.constant 3.125000e-02 : f32
    %4 = vector.broadcast %cst_1 : f32 to vector<16x1xf32>
    %5 = arith.mulf %3, %4 : vector<16x1xf32>
    %cst_2 = arith.constant 9.99999974E-6 : f32
    %6 = vector.broadcast %cst_2 : f32 to vector<16x1xf32>
    %7 = arith.addf %5, %6 : vector<16x1xf32>
    %8 = math.rsqrt %7 : vector<16x1xf32>
    %9 = vector.broadcast %8 : vector<16x1xf32> to vector<16x128xf32>
    %10 = arith.mulf %0, %9 : vector<16x128xf32>
    %c0_3 = arith.constant 0 : index
    %c0_4 = arith.constant 0 : index
    %11 = vector.load %arg2[%c0_3, %c0_4] : memref<1x128xf32, #tpu.memory_space<vmem>>, vector<1x128xf32>
    %12 = vector.broadcast %11 : vector<1x128xf32> to vector<16x128xf32>
    %13 = arith.mulf %10, %12 : vector<16x128xf32>
    %c0_5 = arith.constant 0 : index
    %c0_6 = arith.constant 0 : index
    %14 = vector.load %arg3[%c0_5, %c0_6] : memref<16x128xf32, #tpu.memory_space<vmem>>, vector<16x128xf32>
    tpu.vector_store %arg3[%c0_5, %c0_6], %13 {strides = array<i32>} : memref<16x128xf32, #tpu.memory_space<vmem>>, vector<16x128xf32>,
    return
  }
  func.func @transform_0(%arg0: i32) -> (i32, i32) {
    %c0_i32 = arith.constant 0 : i32
    %c0_i32_0 = arith.constant 0 : i32
    return %arg0, %c0_i32 : i32, i32
  }
  func.func @transform_1(%arg0: i32) -> (i32, i32) {
    %c0_i32 = arith.constant 0 : i32
    %c0_i32_0 = arith.constant 0 : i32
    %c0_i32_1 = arith.constant 0 : i32
    return %c0_i32, %c0_i32_0 : i32, i32
  }
  func.func @transform_2(%arg0: i32) -> (i32, i32) {
    %c0_i32 = arith.constant 0 : i32
    %c0_i32_0 = arith.constant 0 : i32
    return %arg0, %c0_i32 : i32, i32
  }
}

</mosaic_0001>

<llo_original>
// kernel: tpu_custom_call.1
$region0: #{tpu_custom_call.1}
  #allocation0 [shape = 'u32[]', space=smem, size = 0x4, offset = 0x4, fixed_abs, tag = 'smem constant byte address 0x4 - core index']
  #allocation1 [shape = 'u32[144,128]{1,0:T(1,128)}', space=vmem, size = 0x12000, scoped, tag = 'internal scratch']
  %s0 = inlined_call_operand.hbm [shape: f32[16,128], index: 0, kind: input, shape index: {}]
  %s1 = inlined_call_operand.vmem [shape: f32[1,128], index: 1, kind: input, shape index: {}]
  %s2 = inlined_call_operand.hbm [shape: f32[16,128], index: 2, kind: output, shape index: {}]
  %s3 = sld [smem:[#allocation0]]
  $region22: #{tpu_custom_call.1} parent=0
    _
  %s5 = ssub.s32 1, %s3
  %s6 = scalar_select 0, %s5, %s3
  $region1: #{tpu_custom_call.1} parent=0
    #allocation2 [shape = 'u8[8192]{0}', space=vmem, size = 0x2000, scoped, tag = 'input window, operand 0, single buffered']
    #allocation3 [shape = 's32[1]{0}', space=sflag, size = 0x4, scoped, tag = 'scoped memory for tpu_custom_call.1']
    #allocation4 [shape = 's32[1]{0}', space=sflag, size = 0x4, scoped, tag = 'scoped memory for tpu_custom_call.1']
    #allocation5 [shape = 'u8[8192]{0}', space=vmem, size = 0x2000, scoped, tag = 'output window, operand 0, single buffered']
    %7 = vsyncpa [#allocation3], 0
    %8 = vsyncpa [#allocation4], 0
    // Predicated region
    $region2: #{tpu_custom_call.1} parent=1 // pred_check
      _
    $region3: #{tpu_custom_call.1} parent=1 // pred_check_branch
      %10 = sbr.rel (0) target = $region5
    $region4: #{tpu_custom_call.1} parent=1 // pred_region
      %s12 = ssub.s32 256, 256
      %13 = vsyncadd [#allocation3], %s12
      %s14 = sshll.u32 [#allocation2], 4
      %s15 = int_to_ptr.vmem [resolvable:$true] %s14
      %20 = dma.hbm_to_vmem [thread:$0]  %s0, 256, %s15, [#allocation3], 128, 128, 8
    $region5: #{tpu_custom_call.1} parent=1 // pred_fallthru
      _
    // Predicated region
    $region6: #{tpu_custom_call.1} parent=1 // pred_check
      _
    $region7: #{tpu_custom_call.1} parent=1 // pred_check_branch
      %22 = sbr.rel (0) target = $region9
    $region8: #{tpu_custom_call.1} parent=1 // pred_region
      _
    $region9: #{tpu_custom_call.1} parent=1 // pred_fallthru
      _
    // Predicated region
    $region10: #{tpu_custom_call.1} parent=1 // pred_check
      _
    $region11: #{tpu_custom_call.1} parent=1 // pred_check_branch
      %24 = sbr.rel (0) target = $region13
    $region12: #{tpu_custom_call.1} parent=1 // pred_region
      %25 = dma.done [#allocation3], 256
    $region13: #{tpu_custom_call.1} parent=1 // pred_fallthru
      _
    %v26 = vld [vmem:[#allocation2] sm:$0xff]
    %v27 = vld [vmem:[#allocation2 + $0x8] sm:$0xff]
    %v28 = vmul.f32 %v26, %v26
    %v29 = vmul.f32 %v27, %v27
    %30 = vadd.xlane.f32.xlu0 %v28
    %v31 = vpop.xlane.xlu0 %30
    %32 = vadd.xlane.f32.xlu0 %v29
    %v33 = vpop.xlane.xlu0 %32
    %v34 = vmul.f32 %v31, 0.03125
    %v35 = vmul.f32 %v33, 0.03125
    %v36 = vadd.f32 %v34, 1e-05
    %v37 = vadd.f32 %v35, 1e-05
    %v38 = vrsqrt.pop %v36
    %v39 = vrsqrt.pop %v37
    %v40 = vmul.f32 %v26, %v38
    %v41 = vmul.f32 %v27, %v39
    %v42 = vld [vmem:[%s1] sm:$0x1]
    %v44 = vlaneseq
    %v45 = vshrl.u32 %v44, 7
    %v46 = vsub.s32 0, %v45
    %v47 = vrot.slane %v42, %v46
    %v49 = vmul.f32 %v40, %v47
    %v50 = vmul.f32 %v41, %v47
    %51 = vst [vmem:[#allocation5] sm:$0xff] %v49
    %52 = vst [vmem:[#allocation5 + $0x8] sm:$0xff] %v50
    // Predicated region
    $region14: #{tpu_custom_call.1} parent=1 // pred_check
      _
    $region15: #{tpu_custom_call.1} parent=1 // pred_check_branch
      %54 = sbr.rel (0) target = $region17
    $region16: #{tpu_custom_call.1} parent=1 // pred_region
      %s56 = ssub.s32 256, 256
      %57 = vsyncadd [#allocation4], %s56
      %s58 = sshll.u32 [#allocation5], 4
      %s59 = int_to_ptr.vmem [resolvable:$true] %s58
      %64 = dma.vmem_to_hbm [thread:$0]  %s59, 256, %s2, [#allocation4], 128, 128, 8
    $region17: #{tpu_custom_call.1} parent=1 // pred_fallthru
      _
    // Predicated region
    $region18: #{tpu_custom_call.1} parent=1 // pred_check
      _
    $region19: #{tpu_custom_call.1} parent=1 // pred_check_branch
      %66 = sbr.rel (0) target = $region21
    $region20: #{tpu_custom_call.1} parent=1 // pred_region
      %67 = dma.done [#allocation4], 256
    $region21: #{tpu_custom_call.1} parent=1 // pred_fallthru
      _
    %68 = vsyncpa [#allocation3], 1
    %69 = vsyncpa [#allocation4], 1

</llo_original>
